<compile_context>
chip_gen: v6e
topology: v6e:2x2x1
jax: 0.10.0
libtpu: 0.0.40
codegen_flags: <defaults>
</compile_context>

<pallas_src>
import functools

import jax
import jax.numpy as jnp
from jax.experimental import pallas as pl
from jax.experimental.pallas import tpu as pltpu


def _round_up(x: int, m: int) -> int:
    return (x + m - 1) // m * m


def _matmul_kernel(patches_ref, w_ref, out_ref):
    # patches_ref: (TM, Kp) bf16 | w_ref: (Kp, Dp) bf16 | out_ref: (TM, Dp) f32
    out_ref[...] = jnp.dot(
        patches_ref[...], w_ref[...], preferred_element_type=jnp.float32
    ).astype(out_ref.dtype)


@functools.partial(jax.jit, static_argnames=("patch_size", "tm", "compute_dtype"))
def patch_embed(
    x: jax.Array,
    weight: jax.Array,
    patch_size: int,
    tm: int = 1024,
    compute_dtype=jnp.bfloat16,
) -> jax.Array:
    """x: (B, C, H, W); weight: (D, C, p, p)  ->  (B, N, D), N = (H/p)*(W/p)."""
    B, C, H, W = x.shape
    D = weight.shape[0]
    p = patch_size
    assert H % p == 0 and W % p == 0
    Hp, Wp = H // p, W // p
    N = Hp * Wp
    K = C * p * p
    M = B * N
    out_dtype = x.dtype

    # Patch extraction: (B, C, H, W) -> (M, K) with K ordered (C, ph, pw) to
    # match the flattened conv weight (D, C, p, p). With allow_input_fusion,
    # XLA may fuse this producer chain into the pallas operand.
    xp = x.reshape(B, C, Hp, p, Wp, p)
    xp = xp.transpose(0, 2, 4, 1, 3, 5)          # (B, Hp, Wp, C, p, p)
    patches = xp.reshape(M, K)

    # Conv weight (D, C, p, p) -> (K, D)
    w2d = weight.reshape(D, K).T

    # Lane-dense padding: K, D up to multiples of 128; M up to a multiple of TM.
    Kp = _round_up(K, 128)
    Dp = _round_up(D, 128)
    TM = min(tm, _round_up(M, 8))                # TM is a multiple of 8
    Mp = _round_up(M, TM)

    patches = patches.astype(compute_dtype)
    w2d = w2d.astype(compute_dtype)
    if Mp != M or Kp != K:
        patches = jnp.pad(patches, ((0, Mp - M), (0, Kp - K)))
    if Kp != K or Dp != D:
        w2d = jnp.pad(w2d, ((0, Kp - K), (0, Dp - D)))

    grid = (Mp // TM,)
    bytes_in = Mp * Kp * patches.dtype.itemsize + Kp * Dp * w2d.dtype.itemsize
    bytes_out = Mp * Dp * jnp.dtype(out_dtype).itemsize
    cost = pl.CostEstimate(
        flops=2 * Mp * Kp * Dp,
        transcendentals=0,
        bytes_accessed=bytes_in + bytes_out,
    )

    out = pl.pallas_call(
        _matmul_kernel,
        out_shape=jax.ShapeDtypeStruct((Mp, Dp), out_dtype),
        grid_spec=pltpu.PrefetchScalarGridSpec(
            num_scalar_prefetch=0,
            grid=grid,
            in_specs=[
                pl.BlockSpec((TM, Kp), lambda i: (i, 0)),   # patch tiles stream
                pl.BlockSpec((Kp, Dp), lambda i: (0, 0)),   # weight stays resident
            ],
            out_specs=pl.BlockSpec((TM, Dp), lambda i: (i, 0)),
        ),
        compiler_params=pltpu.CompilerParams(
            dimension_semantics=("parallel",),
            # Allow XLA to fuse the patch transpose/cast/pad chain into operand 0;
            # keep the (already tiny) weight as a plain operand.
            allow_input_fusion=[True, False],
        ),
        cost_estimate=cost,
    )(patches, w2d)

    out = out[:M, :D]
    return out.reshape(B, N, D)


def patch_embed_ref(x, weight, patch_size):
    # Pure-JAX reference: strided conv via lax.conv_general_dilated, NCHW.
    y = jax.lax.conv_general_dilated(
        x,
        weight,
        window_strides=(patch_size, patch_size),
        padding="VALID",
        dimension_numbers=("NCHW", "OIHW", "NCHW"),
        precision=jax.lax.Precision.HIGHEST,
    )
    B, D, Hp, Wp = y.shape
    return y.reshape(B, D, Hp * Wp).transpose(0, 2, 1)


if __name__ == "__main__":
    # Small shapes consistent with the module: B=2, C=4, img=16, patch=4, D=32
    B, C, img_size, p, D = 2, 4, 16, 4, 32

    key = jax.random.PRNGKey(0)
    kx, kw = jax.random.split(key)
    x = jax.random.normal(kx, (B, C, img_size, img_size), dtype=jnp.float32)
    # Deterministic "Conv2d" weight (shape (D, C, p, p)), no bias.
    weight = jax.random.normal(kw, (D, C, p, p), dtype=jnp.float32) * 0.02

    out = patch_embed(x, weight, patch_size=p)
    out = jax.block_until_ready(out)

    # Apples-to-apples reference: the kernel computes with bf16 inputs and f32
    # accumulation, so round the inputs to bf16 for the f32 conv reference.
    x_bf = x.astype(jnp.bfloat16).astype(jnp.float32)
    w_bf = weight.astype(jnp.bfloat16).astype(jnp.float32)
    ref = patch_embed_ref(x_bf, w_bf, p)

    assert out.shape == (B, (img_size // p) ** 2, D), out.shape
    assert out.dtype == jnp.float32, out.dtype
    max_err = float(jnp.max(jnp.abs(out - ref)))
    assert jnp.allclose(out, ref, atol=2e-3, rtol=2e-3), f"mismatch vs reference, max_err={max_err}"

    print("KERNEL_OK")
</pallas_src>

<mosaic_0001>
module attributes {stable_mosaic.version = 11 : i64} {
  func.func @_matmul_kernel(%arg0: i32, %arg1: memref<32x128xbf16, #tpu.memory_space<vmem>>, %arg2: memref<128x128xbf16, #tpu.memory_space<vmem>>, %arg3: memref<32x128xf32, #tpu.memory_space<vmem>>) attributes {dimension_semantics = [#tpu.dimension_semantics<parallel>], iteration_bounds = array<i64: 1>, scalar_prefetch = 0 : i64, scratch_operands = 0 : i64, tpu.core_type = #tpu.core_type<tc>, window_params = [{transform_indices = @transform_0, window_bounds = array<i64: 32, 128>}, {pipeline_mode = #tpu.pipeline_mode<synchronous>, transform_indices = @transform_1, window_bounds = array<i64: 128, 128>}, {transform_indices = @transform_2, window_bounds = array<i64: 32, 128>}]} {
    %c0 = arith.constant 0 : index
    %c0_0 = arith.constant 0 : index
    %0 = vector.load %arg1[%c0, %c0_0] : memref<32x128xbf16, #tpu.memory_space<vmem>>, vector<32x128xbf16>
    %c0_1 = arith.constant 0 : index
    %c0_2 = arith.constant 0 : index
    %1 = vector.load %arg2[%c0_1, %c0_2] : memref<128x128xbf16, #tpu.memory_space<vmem>>, vector<128x128xbf16>
    %cst = arith.constant dense<0.000000e+00> : vector<32x128xf32>
    %2 = tpu.matmul %0, %1, %cst {dimension_numbers = #tpu.dot_dimension_numbers<[1], [0], [0], [1], [0, 0, 1, 1], [], []>} : vector<32x128xbf16>, vector<128x128xbf16>, vector<32x128xf32> -> vector<32x128xf32>
    %c0_3 = arith.constant 0 : index
    %c0_4 = arith.constant 0 : index
    %3 = vector.load %arg3[%c0_3, %c0_4] : memref<32x128xf32, #tpu.memory_space<vmem>>, vector<32x128xf32>
    tpu.vector_store %arg3[%c0_3, %c0_4], %2 {strides = array<i32>} : memref<32x128xf32, #tpu.memory_space<vmem>>, vector<32x128xf32>,
    return
  }
  func.func @transform_0(%arg0: i32) -> (i32, i32) {
    %c0_i32 = arith.constant 0 : i32
    %c0_i32_0 = arith.constant 0 : i32
    return %arg0, %c0_i32 : i32, i32
  }
  func.func @transform_1(%arg0: i32) -> (i32, i32) {
    %c0_i32 = arith.constant 0 : i32
    %c0_i32_0 = arith.constant 0 : i32
    %c0_i32_1 = arith.constant 0 : i32
    return %c0_i32, %c0_i32_0 : i32, i32
  }
  func.func @transform_2(%arg0: i32) -> (i32, i32) {
    %c0_i32 = arith.constant 0 : i32
    %c0_i32_0 = arith.constant 0 : i32
    return %arg0, %c0_i32 : i32, i32
  }
}

</mosaic_0001>

<llo_original>
// kernel: patch_embed.2
$region0: #{patch_embed.2}
  #allocation0 [shape = 'u32[]', space=smem, size = 0x4, offset = 0x4, fixed_abs, tag = 'smem constant byte address 0x4 - core index']
  #allocation1 [shape = 'u32[144,128]{1,0:T(1,128)}', space=vmem, size = 0x12000, scoped, tag = 'internal scratch']
  #allocation2 [shape = 'u32[2048]{0}', space=vmem, size = 0x2000, scoped, tag = 'scoped memory for patch_embed.2']
  #allocation3 [shape = 'u32[2048]{0}', space=vmem, size = 0x2000, scoped, tag = 'scoped memory for patch_embed.2']
  #allocation4 [shape = 'u32[2048]{0}', space=vmem, size = 0x2000, scoped, tag = 'scoped memory for patch_embed.2']
  #allocation5 [shape = 'u32[2048]{0}', space=vmem, size = 0x2000, scoped, tag = 'scoped memory for patch_embed.2']
  #allocation6 [shape = 'u32[2048]{0}', space=vmem, size = 0x2000, scoped, tag = 'scoped memory for patch_embed.2']
  %s0 = inlined_call_operand.vmem [shape: bf16[128,128], index: 0, kind: input, shape index: {}]
  %s1 = inlined_call_operand.vmem [shape: bf16[32,64], index: 1, kind: input, shape index: {}]
  %s2 = inlined_call_operand.<no memory space> [shape: bf16[], index: 2, kind: input, shape index: {}]
  %s3 = inlined_call_operand.hbm [shape: f32[32,128], index: 3, kind: output, shape index: {}]
  %s4 = sld [smem:[#allocation0]]
  $region18: #{patch_embed.2} parent=0
    _
  %s6 = ssub.s32 1, %s4
  %s7 = scalar_select 0, %s6, %s4
  %v8 = vstv %s2
  %v9 = vunpack.i.l.bf16 %v8
  %v11 = vunpack.i.h.bf16 %v8
  $region1: #{patch_embed.2} parent=0
    #allocation7 [shape = 'u8[16384]{0}', space=vmem, size = 0x4000, scoped, tag = 'output window, operand 0, single buffered']
    #allocation8 [shape = 's32[1]{0}', space=sflag, size = 0x4, scoped, tag = 'scoped memory for patch_embed.2']
    #allocation9 [shape = 'u8[8192]{0}', space=vmem, size = 0x2000, dematerialized = true, scoped, tag = 'FusionAdapter Buffer %fusion.1 = bf16[32,128]{1,0:T(8,128)(2,1)} fusion(%param_1.1, %param_2), kind=kLoop, calls=%fused_computation.2.clone, metadata={op_name="jit(patch_embed)/jit(_pad)/pad" stack_frame_id=13}']
    %13 = vsyncpa [#allocation8], 0
    // Predicated region
    $region2: #{patch_embed.2} parent=1 // pred_check
      _
    $region3: #{patch_embed.2} parent=1 // pred_check_branch
      %15 = sbr.rel (0) target = $region5
    $region4: #{patch_embed.2} parent=1 // pred_region
      _
    $region5: #{patch_embed.2} parent=1 // pred_fallthru
      _
    // Predicated region
    $region6: #{patch_embed.2} parent=1 // pred_check
      _
    $region7: #{patch_embed.2} parent=1 // pred_check_branch
      %17 = sbr.rel (0) target = $region9
    $region8: #{patch_embed.2} parent=1 // pred_region
      _
    $region9: #{patch_embed.2} parent=1 // pred_fallthru
      _
    %s19 = sor.u32 255, 127
    %s20 = sand.u32 %s19, 85
    %s21 = sshrl.u32 %s20, 1
    %s22 = sor.u32 %s20, %s21
    %s23 = sand.u32 51, %s22
    %s24 = sshrl.u32 %s23, 2
    %s25 = sor.u32 %s23, %s24
    %s26 = sand.u32 15, %s25
    %v27 = vld [vmem:[%s1] sm:%s26]
    %v28 = vunpack.c.l.bf16 %v27
    %v29 = vunpack.c.h.bf16 %v27
    %v30 = vlaneseq
    %v31 = vand.u32 %v30, 127
    %vm33 = vcmp.lt.s32.totalorder %v31, 64
    %v34 = vsel %vm33, %v28, %v9
    %v35 = vpack.c.bf16 0.0, %v34
    %s37 = ssub.s32 16, 1
    %38 = vst [vmem:[#allocation9] sm:%s37] %v35
    %s39 = scalar_lea.vmem %s1, 4
    %s41 = sor.u32 255, 127
    %s42 = sand.u32 %s41, 85
    %s43 = sshrl.u32 %s42, 1
    %s44 = sor.u32 %s42, %s43
    %s45 = sand.u32 51, %s44
    %s46 = sshrl.u32 %s45, 2
    %s47 = sor.u32 %s45, %s46
    %s48 = sand.u32 15, %s47
    %v49 = vld [vmem:[%s39] sm:%s48]
    %v50 = vunpack.c.l.bf16 %v49
    %v51 = vunpack.c.h.bf16 %v49
    %v52 = vlaneseq
    %v53 = vand.u32 %v52, 127
    %vm55 = vcmp.lt.s32.totalorder %v53, 64
    %v56 = vsel %vm55, %v50, %v9
    %s57 = scalar_lea.vmem [#allocation9], 4
    %v58 = vpack.c.bf16 0.0, %v56
    %s60 = ssub.s32 16, 1
    %61 = vst [vmem:[%s57] sm:%s60] %v58
    %s62 = scalar_lea.vmem %s1, 8
    %s64 = sor.u32 255, 127
    %s65 = sand.u32 %s64, 85
    %s66 = sshrl.u32 %s65, 1
    %s67 = sor.u32 %s65, %s66
    %s68 = sand.u32 51, %s67
    %s69 = sshrl.u32 %s68, 2
    %s70 = sor.u32 %s68, %s69
    %s71 = sand.u32 15, %s70
    %v72 = vld [vmem:[%s62] sm:%s71]
    %v73 = vunpack.c.l.bf16 %v72
    %v74 = vunpack.c.h.bf16 %v72
    %v75 = vlaneseq
    %v76 = vand.u32 %v75, 127
    %vm78 = vcmp.lt.s32.totalorder %v76, 64
    %v79 = vsel %vm78, %v73, %v9
    %s80 = scalar_lea.vmem [#allocation9], 8
    %v81 = vpack.c.bf16 0.0, %v79
    %s83 = ssub.s32 16, 1
    %84 = vst [vmem:[%s80] sm:%s83] %v81
    %s85 = scalar_lea.vmem %s1, 12
    %s87 = sor.u32 255, 127
    %s88 = sand.u32 %s87, 85
    %s89 = sshrl.u32 %s88, 1
    %s90 = sor.u32 %s88, %s89
    %s91 = sand.u32 51, %s90
    %s92 = sshrl.u32 %s91, 2
    %s93 = sor.u32 %s91, %s92
    %s94 = sand.u32 15, %s93
    %v95 = vld [vmem:[%s85] sm:%s94]
    %v96 = vunpack.c.l.bf16 %v95
    %v97 = vunpack.c.h.bf16 %v95
    %v98 = vlaneseq
    %v99 = vand.u32 %v98, 127
    %vm101 = vcmp.lt.s32.totalorder %v99, 64
    %v102 = vsel %vm101, %v96, %v9
    %s103 = scalar_lea.vmem [#allocation9], 12
    %v104 = vpack.c.bf16 0.0, %v102
    %s106 = ssub.s32 16, 1
    %107 = vst [vmem:[%s103] sm:%s106] %v104
    %v109 = vld [vmem:[#allocation9] sm:$0xf]
    %v110 = vld [vmem:[#allocation9 + $0x4] sm:$0xf]
    %v111 = vld [vmem:[#allocation9 + $0x8] sm:$0xf]
    %v112 = vld [vmem:[#allocation9 + $0xc] sm:$0xf]
    %v113 = vld [vmem:[%s0] sm:$0xf]
    %v114 = vld [vmem:[%s0 + $0x4] sm:$0xf]
    %v115 = vld [vmem:[%s0 + $0x8] sm:$0xf]
    %v116 = vld [vmem:[%s0 + $0xc] sm:$0xf]
    %v117 = vld [vmem:[%s0 + $0x10] sm:$0xf]
    %v118 = vld [vmem:[%s0 + $0x14] sm:$0xf]
    %v119 = vld [vmem:[%s0 + $0x18] sm:$0xf]
    %v120 = vld [vmem:[%s0 + $0x1c] sm:$0xf]
    %v121 = vld [vmem:[%s0 + $0x20] sm:$0xf]
    %v122 = vld [vmem:[%s0 + $0x24] sm:$0xf]
    %v123 = vld [vmem:[%s0 + $0x28] sm:$0xf]
    %v124 = vld [vmem:[%s0 + $0x2c] sm:$0xf]
    %v125 = vld [vmem:[%s0 + $0x30] sm:$0xf]
    %v126 = vld [vmem:[%s0 + $0x34] sm:$0xf]
    %v127 = vld [vmem:[%s0 + $0x38] sm:$0xf]
    %v128 = vld [vmem:[%s0 + $0x3c] sm:$0xf]
    %v133 = vunpack.c.l.b16 %v109
    %v134 = vunpack.c.l.b16 %v110
    %v135 = vunpack.c.l.b16 %v111
    %v136 = vunpack.c.l.b16 %v112
    %v137 = vpack.c.b16 %v134, %v133
    %v138 = vpack.c.b16 %v136, %v135
    %v157 = vunpack.c.l.b16 %v113
    %v158 = vunpack.c.l.b16 %v114
    %v159 = vunpack.c.l.b16 %v115
    %v160 = vunpack.c.l.b16 %v116
    %v161 = vunpack.c.l.b16 %v117
    %v162 = vunpack.c.l.b16 %v118
    %v163 = vunpack.c.l.b16 %v119
    %v164 = vunpack.c.l.b16 %v120
    %v165 = vunpack.c.l.b16 %v121
    %v166 = vunpack.c.l.b16 %v122
    %v167 = vunpack.c.l.b16 %v123
    %v168 = vunpack.c.l.b16 %v124
    %v169 = vunpack.c.l.b16 %v125
    %v170 = vunpack.c.l.b16 %v126
    %v171 = vunpack.c.l.b16 %v127
    %v172 = vunpack.c.l.b16 %v128
    %v173 = vpack.c.b16 %v158, %v157
    %v174 = vpack.c.b16 %v160, %v159
    %v175 = vpack.c.b16 %v162, %v161
    %v176 = vpack.c.b16 %v164, %v163
    %v177 = vpack.c.b16 %v166, %v165
    %v178 = vpack.c.b16 %v168, %v167
    %v179 = vpack.c.b16 %v170, %v169
    %v180 = vpack.c.b16 %v172, %v171
    %189 = vmatprep.subr.bf16.mxu0 0
    %190 = vmatpush1.bf16.msra.mxu0 %v180
    %191 = vmatprep.subr.bf16.mxu0 0
    %192 = vmatpush1.bf16.msra.mxu0 %v179
    %193 = vmatprep.subr.bf16.mxu0 0
    %194 = vmatpush1.bf16.msra.mxu0 %v178
    %195 = vmatprep.subr.bf16.mxu0 0
    %196 = vmatpush1.bf16.msra.mxu0 %v177
    %197 = vmatprep.subr.bf16.mxu0 0
    %198 = vmatpush1.bf16.msra.mxu0 %v176
    %199 = vmatprep.subr.bf16.mxu0 0
    %200 = vmatpush1.bf16.msra.mxu0 %v175
    %201 = vmatprep.subr.bf16.mxu0 0
    %202 = vmatpush1.bf16.msra.mxu0 %v174
    %203 = vmatprep.subr.bf16.mxu0 0
    %204 = vmatpush1.bf16.msra.mxu0 %v173
    %205 = vmatprep.subr.bf16.mxu0 0
    %206 = vmatpush2.bf16.msra.mxu0 0
    %207 = vmatprep.subr.bf16.mxu0 0
    %208 = vmatpush2.bf16.msra.mxu0 0
    %209 = vmatprep.subr.bf16.mxu0 0
    %210 = vmatpush2.bf16.msra.mxu0 0
    %211 = vmatprep.subr.bf16.mxu0 0
    %212 = vmatpush2.bf16.msra.mxu0 0
    %213 = vmatprep.subr.bf16.mxu0 0
    %214 = vmatpush2.bf16.msra.mxu0 0
    %215 = vmatprep.subr.bf16.mxu0 0
    %216 = vmatpush2.bf16.msra.mxu0 0
    %217 = vmatprep.subr.bf16.mxu0 0
    %218 = vmatpush2.bf16.msra.mxu0 0
    %219 = vmatprep.subr.bf16.mxu0 0
    %220 = vmatpush2.bf16.msra.mxu0 0
    %221 = vmatprep.mubr.bf16.mxu0 0
    %222 = vmatmul.mubr.bf16.gmra.mxu0 %v137
    %v223 = vpop.f32.mrf.mxu0
    %v224 = vadd.f32 0.0, %v223
    %v225 = vpop.f32.mrf.mxu0
    %v226 = vpop.f32.mrf.mxu0
    %v227 = vadd.f32 0.0, %v226
    %v228 = vpop.f32.mrf.mxu0
    %229 = vmatprep.mubr.bf16.mxu0 0
    %230 = vmatmul.mubr.bf16.gmra.mxu0 %v138
    %v231 = vpop.f32.mrf.mxu0
    %v232 = vadd.f32 0.0, %v231
    %v233 = vpop.f32.mrf.mxu0
    %v234 = vpop.f32.mrf.mxu0
    %v235 = vadd.f32 0.0, %v234
    %v236 = vpop.f32.mrf.mxu0
    %237 = vdwg.mxu0
    %238 = vst [vmem:[#allocation7] sm:$0xff] %v224
    %239 = vst [vmem:[#allocation7 + $0x8] sm:$0xff] %v227
    %240 = vst [vmem:[#allocation7 + $0x10] sm:$0xff] %v232
    %241 = vst [vmem:[#allocation7 + $0x18] sm:$0xff] %v235
    // Predicated region
    $region10: #{patch_embed.2} parent=1 // pred_check
      _
    $region11: #{patch_embed.2} parent=1 // pred_check_branch
      %243 = sbr.rel (0) target = $region13
    $region12: #{patch_embed.2} parent=1 // pred_region
      %s245 = ssub.s32 512, 512
      %246 = vsyncadd [#allocation8], %s245
      %s247 = sshll.u32 [#allocation7], 4
      %s248 = int_to_ptr.vmem [resolvable:$true] %s247
      %253 = dma.vmem_to_hbm [thread:$0]  %s248, 512, %s3, [#allocation8], 128, 128, 8
    $region13: #{patch_embed.2} parent=1 // pred_fallthru
      _
    // Predicated region
    $region14: #{patch_embed.2} parent=1 // pred_check
      _
    $region15: #{patch_embed.2} parent=1 // pred_check_branch
      %255 = sbr.rel (0) target = $region17
    $region16: #{patch_embed.2} parent=1 // pred_region
      %256 = dma.done [#allocation8], 512
    $region17: #{patch_embed.2} parent=1 // pred_fallthru
      _
    %257 = vsyncpa [#allocation8], 1

</llo_original>
